<compile_context>
chip_gen: v5e
topology: v5e:2x2
jax: 0.10.0
libtpu: 0.0.40
codegen_flags: <defaults>
</compile_context>

<pallas_src>
import functools

import jax
import jax.numpy as jnp
import numpy as np
from jax.experimental import pallas as pl
from jax.experimental.pallas import tpu as pltpu

# Flip to jnp.bfloat16 on v6e/v7x for ~3x fewer MXU passes on the serial chain
# (per review); the correctness tolerance below adapts automatically.
MXU_INPUT_DTYPE = jnp.float32


# ----------------------------------------------------------------------------
# Path bookkeeping (pure python glue, identical to the torch helpers)
# ----------------------------------------------------------------------------
def create_paths(max_depth: int, branching_factor: int) -> list[list[int]]:
    paths = [[]]
    for node_idx in range(1, branching_factor ** max_depth):
        root_idx = (node_idx - 1) // branching_factor
        branch_idx = (node_idx - 1) % branching_factor
        path = paths[root_idx] + [branch_idx]
        paths.append(path)
    return [[branching_factor + 1]] * 2 + paths


def build_path_words(positions, paths, branching_factor):
    # torch: pad_sequence(..., padding_value=branching_factor)
    seqs = [paths[pos + 2] if pos > 0 else [] for pos in positions]
    max_len = max(1, max((len(s) for s in seqs), default=0))
    pw = np.full((len(positions), max_len), branching_factor, dtype=np.int32)
    for i, s in enumerate(seqs):
        if len(s) > 0:
            pw[i, : len(s)] = np.asarray(s, dtype=np.int32)
    return pw


def build_branch_cols(path_words: np.ndarray, dim: int) -> np.ndarray:
    # branch_cols[l, i*dim + c] = path_words[i, l]   (host-side numpy constant)
    return np.repeat(path_words.T, dim, axis=1).astype(np.int32)


# ----------------------------------------------------------------------------
# Fused Pallas kernel: transposed batched matmul chain + steps matrix.
# ----------------------------------------------------------------------------
def fused_kernel(branch_ref, prim_ref, pw_ref, pwt_ref, maps_ref, steps_ref,
                 *, bf: int, N: int, dim: int, L: int, mxu_dtype):
    # branch_ref: (L, N*dim) int32  -- per-column branch index for each step
    # prim_ref  : (bf*dim, dim) f32 -- P_0..P_{bf-1} stacked along rows
    # pw_ref    : (N, L) int32, pwt_ref: (L, N) int32
    # maps_ref  : (dim, N*dim) f32  -- transposed maps slab (block i = maps[i].T)
    # steps_ref : (N, N) int32
    ND = N * dim

    # ---- maps: batched chain over all N positions in the lane-dense layout --
    # Identity slab: M_T[r, i*dim + c] = (r == c).  One iota compare.
    sub = jax.lax.broadcasted_iota(jnp.int32, (dim, ND), 0)
    lane = jax.lax.broadcasted_iota(jnp.int32, (dim, ND), 1)
    M = (sub == (lane % dim)).astype(jnp.float32)

    # Stacked primitives loaded once; cast for the MXU once (not per step).
    Pcat = prim_ref[...].astype(mxu_dtype)            # (bf*dim, dim)

    for l in range(L):                                 # small static L -> unrolled
        bcol = jnp.broadcast_to(branch_ref[l:l + 1, :], (dim, ND))   # int32
        # One fused matmul per chain step: all branch candidates at once.
        #   cand[b*dim:(b+1)*dim, :] = P_b @ M_T
        cand = jax.lax.dot_general(
            Pcat, M.astype(mxu_dtype), (((1,), (0,)), ((), ())),
            preferred_element_type=jnp.float32)        # (bf*dim, N*dim)
        Mn = M                                         # padding (== bf) keeps M
        for b in range(bf):
            Mn = jnp.where(bcol == b, cand[b * dim:(b + 1) * dim, :], Mn)
        M = Mn
    maps_ref[...] = M.astype(maps_ref.dtype)           # full-width unmasked store

    # ---- steps: pairwise reduction over the path words (free VPU filler) ----
    pw = pw_ref[...]
    pwt = pwt_ref[...]
    pm = (pw != bf + 1).astype(jnp.int32)               # (N, L)
    pmt = (pwt != bf + 1).astype(jnp.int32)              # (L, N)
    sum_col = jnp.sum(pm, axis=1, keepdims=True)         # (N, 1)
    sum_row = jnp.sum(pmt, axis=0, keepdims=True)        # (1, N)

    alive = jnp.ones((N, N), dtype=jnp.int32)             # cumprod of equality
    cpl = jnp.zeros((N, N), dtype=jnp.int32)              # common prefix length
    for l in range(L):                                    # static unroll
        eq = (pw[:, l:l + 1] == pwt[l:l + 1, :]).astype(jnp.int32)
        m = pm[:, l:l + 1] * pmt[l:l + 1, :]
        alive = alive * eq
        cpl = cpl + alive * m

    steps_ref[...] = sum_col + sum_row - 2 * cpl


@jax.jit
def compute_embed(branch_cols, path_words, path_words_t, primitives_bf):
    N, L = path_words.shape
    bf, dim, _ = primitives_bf.shape
    prim_cat = primitives_bf.reshape(bf * dim, dim)      # free contiguous reshape

    maps_t, steps = pl.pallas_call(
        functools.partial(fused_kernel, bf=bf, N=N, dim=dim, L=L,
                          mxu_dtype=MXU_INPUT_DTYPE),
        out_shape=(
            jax.ShapeDtypeStruct((dim, N * dim), jnp.float32),
            jax.ShapeDtypeStruct((N, N), jnp.int32),
        ),
        grid=(1,),
        in_specs=[
            pl.BlockSpec((L, N * dim), lambda i: (0, 0)),
            pl.BlockSpec((bf * dim, dim), lambda i: (0, 0)),
            pl.BlockSpec((N, L), lambda i: (0, 0)),
            pl.BlockSpec((L, N), lambda i: (0, 0)),
        ],
        out_specs=(
            pl.BlockSpec((dim, N * dim), lambda i: (0, 0)),
            pl.BlockSpec((N, N), lambda i: (0, 0)),
        ),
        compiler_params=pltpu.CompilerParams(dimension_semantics=("arbitrary",)),
    )(branch_cols, prim_cat, path_words, path_words_t)

    # Un-transpose (review-sanctioned wrapper op): maps[i][a, b] = maps_t[b, i*dim + a]
    maps = jnp.transpose(maps_t.reshape(dim, N, dim), (1, 2, 0))[:, None]
    return maps, steps


# ----------------------------------------------------------------------------
# Parameter setup (deterministic, synthetic)
# ----------------------------------------------------------------------------
def init_primitives(key, dim, branching_factor, num_heads):
    # TODO(synk): rope_like_init uses scipy logm + a 10k-step AdamW fit; this is
    # offline parameter initialisation, replaced here by a deterministic random
    # skew-symmetric generator of the same shape.
    n = branching_factor * num_heads + 1
    base = 0.02 * jax.random.normal(key, (n, dim, dim), dtype=jnp.float32)
    hermitian = base - jnp.swapaxes(base, -1, -2)     # A - A^T (real => A.mH == A.T)
    primitives = jax.scipy.linalg.expm(hermitian)     # torch.matrix_exp equivalent
    return primitives


# ----------------------------------------------------------------------------
# Reference (plain numpy) for a correctness check
# ----------------------------------------------------------------------------
def reference_embed(path_words, primitives_bf):
    N, L = path_words.shape
    bf, dim, _ = primitives_bf.shape
    maps = np.tile(np.eye(dim, dtype=np.float32), (N, 1, 1))
    for step in range(L):
        for branch in range(bf):
            m = path_words[:, step] == branch
            if m.any():
                maps[m] = maps[m] @ primitives_bf[branch].T
    # create_steps semantics (pad value = bf, point_mask checks != bf+1), as in torch.
    pm = (path_words != bf + 1).astype(np.int64)
    mask = pm[:, None, :] & pm[None, :, :]
    peq = (path_words[:, None, :] == path_words[None, :, :]).astype(np.int64)
    common_prefix = (np.cumprod(peq, axis=-1) > 0) & (mask > 0)
    sum_lens = pm.sum(-1)[:, None] + pm.sum(-1)[None, :]
    steps = sum_lens - 2 * common_prefix.sum(-1)
    return maps.reshape(N, 1, dim, dim), steps.astype(np.int32)


if __name__ == "__main__":
    dim = 32
    branching_factor = 2
    num_heads = 4
    positions = [1, 2, 3, 4, 5, 6, 7, 8]   # N = 8 positions

    key = jax.random.PRNGKey(0)
    primitives_all = init_primitives(key, dim, branching_factor, num_heads)
    primitives_bf = primitives_all[:branching_factor]       # only the first `bf` are used

    paths = create_paths(16, branching_factor)
    path_words = build_path_words(positions, paths, branching_factor)     # (N, L) int32
    branch_cols = build_branch_cols(path_words, dim)                      # (L, N*dim) int32
    path_words_t = np.ascontiguousarray(path_words.T)                     # (L, N) int32

    maps, steps = compute_embed(
        jnp.asarray(branch_cols), jnp.asarray(path_words),
        jnp.asarray(path_words_t), primitives_bf)
    jax.block_until_ready((maps, steps))

    maps_ref, steps_ref = reference_embed(path_words, np.asarray(primitives_bf))
    tol = 1e-3 if MXU_INPUT_DTYPE == jnp.float32 else 2e-2   # bf16 MXU inputs lose ~3 digits/step
    assert np.allclose(np.asarray(maps), maps_ref, atol=tol, rtol=tol)
    assert np.array_equal(np.asarray(steps), steps_ref)

    print("KERNEL_OK")
</pallas_src>

<mosaic_0001>
module attributes {stable_mosaic.version = 11 : i64} {
  func.func @fused_kernel(%arg0: i32, %arg1: memref<3x256xi32, #tpu.memory_space<vmem>>, %arg2: memref<64x32xf32, #tpu.memory_space<vmem>>, %arg3: memref<8x3xi32, #tpu.memory_space<vmem>>, %arg4: memref<3x8xi32, #tpu.memory_space<vmem>>, %arg5: memref<32x256xf32, #tpu.memory_space<vmem>>, %arg6: memref<8x8xi32, #tpu.memory_space<vmem>>) attributes {dimension_semantics = [#tpu.dimension_semantics<arbitrary>], iteration_bounds = array<i64: 1>, scalar_prefetch = 0 : i64, scratch_operands = 0 : i64, tpu.core_type = #tpu.core_type<tc>, window_params = [{pipeline_mode = #tpu.pipeline_mode<synchronous>, transform_indices = @transform_0, window_bounds = array<i64: 3, 256>}, {pipeline_mode = #tpu.pipeline_mode<synchronous>, transform_indices = @transform_1, window_bounds = array<i64: 64, 32>}, {pipeline_mode = #tpu.pipeline_mode<synchronous>, transform_indices = @transform_2, window_bounds = array<i64: 8, 3>}, {pipeline_mode = #tpu.pipeline_mode<synchronous>, transform_indices = @transform_3, window_bounds = array<i64: 3, 8>}, {pipeline_mode = #tpu.pipeline_mode<synchronous>, transform_indices = @transform_4, window_bounds = array<i64: 32, 256>}, {pipeline_mode = #tpu.pipeline_mode<synchronous>, transform_indices = @transform_5, window_bounds = array<i64: 8, 8>}]} {
    %0 = tpu.iota {dimensions = array<i32: 0>} : vector<32x256xi32>
    %1 = tpu.iota {dimensions = array<i32: 1>} : vector<32x256xi32>
    %c32_i32 = arith.constant 32 : i32
    %c0_i32 = arith.constant 0 : i32
    %2 = arith.cmpi eq, %c32_i32, %c0_i32 : i32
    %c1_i32 = arith.constant 1 : i32
    %3 = arith.select %2, %c1_i32, %c32_i32 : i32
    %4 = vector.broadcast %3 : i32 to vector<32x256xi32>
    %5 = arith.remsi %1, %4 : vector<32x256xi32>
    %c0_i32_0 = arith.constant 0 : i32
    %6 = vector.broadcast %c0_i32_0 : i32 to vector<32x256xi32>
    %7 = arith.cmpi ne, %5, %6 : vector<32x256xi32>
    %c0_i32_1 = arith.constant 0 : i32
    %8 = vector.broadcast %c0_i32_1 : i32 to vector<32x256xi32>
    %9 = arith.cmpi slt, %5, %8 : vector<32x256xi32>
    %c0_i32_2 = arith.constant 0 : i32
    %10 = arith.cmpi slt, %3, %c0_i32_2 : i32
    %11 = vector.broadcast %10 : i1 to vector<32x256xi1>
    %12 = vector.broadcast %11 : vector<32x256xi1> to vector<32x256xi1>
    %13 = arith.xori %9, %12 : vector<32x256xi1>
    %14 = arith.andi %13, %7 : vector<32x256xi1>
    %15 = vector.broadcast %3 : i32 to vector<32x256xi32>
    %16 = arith.addi %5, %15 : vector<32x256xi32>
    %17 = arith.select %14, %16, %5 : vector<32x256xi1>, vector<32x256xi32>
    %18 = arith.cmpi eq, %0, %17 : vector<32x256xi32>
    %19 = arith.extui %18 : vector<32x256xi1> to vector<32x256xi32>
    %20 = arith.sitofp %19 : vector<32x256xi32> to vector<32x256xf32>
    %c0 = arith.constant 0 : index
    %c0_3 = arith.constant 0 : index
    %21 = vector.load %arg2[%c0, %c0_3] : memref<64x32xf32, #tpu.memory_space<vmem>>, vector<64x32xf32>
    %c0_4 = arith.constant 0 : index
    %c0_5 = arith.constant 0 : index
    %22 = vector.load %arg1[%c0_4, %c0_5] : memref<3x256xi32, #tpu.memory_space<vmem>>, vector<1x256xi32>
    %23 = vector.shape_cast %22 : vector<1x256xi32> to vector<1x256xi32>
    %24 = vector.broadcast %23 : vector<1x256xi32> to vector<32x256xi32>
    %cst = arith.constant dense<0.000000e+00> : vector<64x256xf32>
    %25 = tpu.matmul %21, %20, %cst {dimension_numbers = #tpu.dot_dimension_numbers<[1], [0], [0], [1], [0, 0, 1, 1], [], []>} : vector<64x32xf32>, vector<32x256xf32>, vector<64x256xf32> -> vector<64x256xf32>
    %c0_i32_6 = arith.constant 0 : i32
    %26 = vector.broadcast %c0_i32_6 : i32 to vector<32x256xi32>
    %27 = arith.cmpi eq, %24, %26 : vector<32x256xi32>
    %28 = vector.extract_strided_slice %25 {offsets = [0, 0], sizes = [32, 256], strides = [1, 1]} : vector<64x256xf32> to vector<32x256xf32>
    %29 = arith.select %27, %28, %20 : vector<32x256xi1>, vector<32x256xf32>
    %c1_i32_7 = arith.constant 1 : i32
    %30 = vector.broadcast %c1_i32_7 : i32 to vector<32x256xi32>
    %31 = arith.cmpi eq, %24, %30 : vector<32x256xi32>
    %32 = vector.extract_strided_slice %25 {offsets = [32, 0], sizes = [32, 256], strides = [1, 1]} : vector<64x256xf32> to vector<32x256xf32>
    %33 = arith.select %31, %32, %29 : vector<32x256xi1>, vector<32x256xf32>
    %c1 = arith.constant 1 : index
    %c0_8 = arith.constant 0 : index
    %34 = vector.load %arg1[%c1, %c0_8] : memref<3x256xi32, #tpu.memory_space<vmem>>, vector<1x256xi32>
    %35 = vector.shape_cast %34 : vector<1x256xi32> to vector<1x256xi32>
    %36 = vector.broadcast %35 : vector<1x256xi32> to vector<32x256xi32>
    %cst_9 = arith.constant dense<0.000000e+00> : vector<64x256xf32>
    %37 = tpu.matmul %21, %33, %cst_9 {dimension_numbers = #tpu.dot_dimension_numbers<[1], [0], [0], [1], [0, 0, 1, 1], [], []>} : vector<64x32xf32>, vector<32x256xf32>, vector<64x256xf32> -> vector<64x256xf32>
    %c0_i32_10 = arith.constant 0 : i32
    %38 = vector.broadcast %c0_i32_10 : i32 to vector<32x256xi32>
    %39 = arith.cmpi eq, %36, %38 : vector<32x256xi32>
    %40 = vector.extract_strided_slice %37 {offsets = [0, 0], sizes = [32, 256], strides = [1, 1]} : vector<64x256xf32> to vector<32x256xf32>
    %41 = arith.select %39, %40, %33 : vector<32x256xi1>, vector<32x256xf32>
    %c1_i32_11 = arith.constant 1 : i32
    %42 = vector.broadcast %c1_i32_11 : i32 to vector<32x256xi32>
    %43 = arith.cmpi eq, %36, %42 : vector<32x256xi32>
    %44 = vector.extract_strided_slice %37 {offsets = [32, 0], sizes = [32, 256], strides = [1, 1]} : vector<64x256xf32> to vector<32x256xf32>
    %45 = arith.select %43, %44, %41 : vector<32x256xi1>, vector<32x256xf32>
    %c2 = arith.constant 2 : index
    %c0_12 = arith.constant 0 : index
    %46 = vector.load %arg1[%c2, %c0_12] : memref<3x256xi32, #tpu.memory_space<vmem>>, vector<1x256xi32>
    %47 = vector.shape_cast %46 : vector<1x256xi32> to vector<1x256xi32>
    %48 = vector.broadcast %47 : vector<1x256xi32> to vector<32x256xi32>
    %cst_13 = arith.constant dense<0.000000e+00> : vector<64x256xf32>
    %49 = tpu.matmul %21, %45, %cst_13 {dimension_numbers = #tpu.dot_dimension_numbers<[1], [0], [0], [1], [0, 0, 1, 1], [], []>} : vector<64x32xf32>, vector<32x256xf32>, vector<64x256xf32> -> vector<64x256xf32>
    %c0_i32_14 = arith.constant 0 : i32
    %50 = vector.broadcast %c0_i32_14 : i32 to vector<32x256xi32>
    %51 = arith.cmpi eq, %48, %50 : vector<32x256xi32>
    %52 = vector.extract_strided_slice %49 {offsets = [0, 0], sizes = [32, 256], strides = [1, 1]} : vector<64x256xf32> to vector<32x256xf32>
    %53 = arith.select %51, %52, %45 : vector<32x256xi1>, vector<32x256xf32>
    %c1_i32_15 = arith.constant 1 : i32
    %54 = vector.broadcast %c1_i32_15 : i32 to vector<32x256xi32>
    %55 = arith.cmpi eq, %48, %54 : vector<32x256xi32>
    %56 = vector.extract_strided_slice %49 {offsets = [32, 0], sizes = [32, 256], strides = [1, 1]} : vector<64x256xf32> to vector<32x256xf32>
    %57 = arith.select %55, %56, %53 : vector<32x256xi1>, vector<32x256xf32>
    %c0_16 = arith.constant 0 : index
    %c0_17 = arith.constant 0 : index
    %58 = vector.load %arg5[%c0_16, %c0_17] : memref<32x256xf32, #tpu.memory_space<vmem>>, vector<32x256xf32>
    tpu.vector_store %arg5[%c0_16, %c0_17], %57 {strides = array<i32>} : memref<32x256xf32, #tpu.memory_space<vmem>>, vector<32x256xf32>,
    %c0_18 = arith.constant 0 : index
    %c0_19 = arith.constant 0 : index
    %59 = vector.load %arg3[%c0_18, %c0_19] : memref<8x3xi32, #tpu.memory_space<vmem>>, vector<8x3xi32>
    %c0_20 = arith.constant 0 : index
    %c0_21 = arith.constant 0 : index
    %60 = vector.load %arg4[%c0_20, %c0_21] : memref<3x8xi32, #tpu.memory_space<vmem>>, vector<3x8xi32>
    %c3_i32 = arith.constant 3 : i32
    %61 = vector.broadcast %c3_i32 : i32 to vector<8x3xi32>
    %62 = arith.cmpi ne, %59, %61 : vector<8x3xi32>
    %63 = arith.extui %62 : vector<8x3xi1> to vector<8x3xi32>
    %c3_i32_22 = arith.constant 3 : i32
    %64 = vector.broadcast %c3_i32_22 : i32 to vector<3x8xi32>
    %65 = arith.cmpi ne, %60, %64 : vector<3x8xi32>
    %66 = arith.extui %65 : vector<3x8xi1> to vector<3x8xi32>
    %cst_23 = arith.constant dense<0> : vector<8xi32>
    %67 = vector.multi_reduction <add>, %63, %cst_23 [1] : vector<8x3xi32> to vector<8xi32>
    %68 = vector.shape_cast %67 : vector<8xi32> to vector<8x1xi32>
    %cst_24 = arith.constant dense<0> : vector<8xi32>
    %69 = vector.multi_reduction <add>, %66, %cst_24 [0] : vector<3x8xi32> to vector<8xi32>
    %70 = vector.shape_cast %69 : vector<8xi32> to vector<1x8xi32>
    %c1_i32_25 = arith.constant 1 : i32
    %71 = vector.broadcast %c1_i32_25 : i32 to vector<8x8xi32>
    %c0_i32_26 = arith.constant 0 : i32
    %72 = vector.broadcast %c0_i32_26 : i32 to vector<8x8xi32>
    %73 = vector.extract_strided_slice %59 {offsets = [0, 0], sizes = [8, 1], strides = [1, 1]} : vector<8x3xi32> to vector<8x1xi32>
    %74 = vector.extract_strided_slice %60 {offsets = [0, 0], sizes = [1, 8], strides = [1, 1]} : vector<3x8xi32> to vector<1x8xi32>
    %75 = vector.broadcast %73 : vector<8x1xi32> to vector<8x8xi32>
    %76 = vector.broadcast %74 : vector<1x8xi32> to vector<8x8xi32>
    %77 = arith.cmpi eq, %75, %76 : vector<8x8xi32>
    %78 = arith.extui %77 : vector<8x8xi1> to vector<8x8xi32>
    %79 = vector.extract_strided_slice %63 {offsets = [0, 0], sizes = [8, 1], strides = [1, 1]} : vector<8x3xi32> to vector<8x1xi32>
    %80 = vector.extract_strided_slice %66 {offsets = [0, 0], sizes = [1, 8], strides = [1, 1]} : vector<3x8xi32> to vector<1x8xi32>
    %81 = vector.broadcast %79 : vector<8x1xi32> to vector<8x8xi32>
    %82 = vector.broadcast %80 : vector<1x8xi32> to vector<8x8xi32>
    %83 = arith.muli %81, %82 : vector<8x8xi32>
    %84 = arith.muli %71, %78 : vector<8x8xi32>
    %85 = arith.muli %84, %83 : vector<8x8xi32>
    %86 = arith.addi %72, %85 : vector<8x8xi32>
    %87 = vector.extract_strided_slice %59 {offsets = [0, 1], sizes = [8, 1], strides = [1, 1]} : vector<8x3xi32> to vector<8x1xi32>
    %88 = vector.extract_strided_slice %60 {offsets = [1, 0], sizes = [1, 8], strides = [1, 1]} : vector<3x8xi32> to vector<1x8xi32>
    %89 = vector.broadcast %87 : vector<8x1xi32> to vector<8x8xi32>
    %90 = vector.broadcast %88 : vector<1x8xi32> to vector<8x8xi32>
    %91 = arith.cmpi eq, %89, %90 : vector<8x8xi32>
    %92 = arith.extui %91 : vector<8x8xi1> to vector<8x8xi32>
    %93 = vector.extract_strided_slice %63 {offsets = [0, 1], sizes = [8, 1], strides = [1, 1]} : vector<8x3xi32> to vector<8x1xi32>
    %94 = vector.extract_strided_slice %66 {offsets = [1, 0], sizes = [1, 8], strides = [1, 1]} : vector<3x8xi32> to vector<1x8xi32>
    %95 = vector.broadcast %93 : vector<8x1xi32> to vector<8x8xi32>
    %96 = vector.broadcast %94 : vector<1x8xi32> to vector<8x8xi32>
    %97 = arith.muli %95, %96 : vector<8x8xi32>
    %98 = arith.muli %84, %92 : vector<8x8xi32>
    %99 = arith.muli %98, %97 : vector<8x8xi32>
    %100 = arith.addi %86, %99 : vector<8x8xi32>
    %101 = vector.extract_strided_slice %59 {offsets = [0, 2], sizes = [8, 1], strides = [1, 1]} : vector<8x3xi32> to vector<8x1xi32>
    %102 = vector.extract_strided_slice %60 {offsets = [2, 0], sizes = [1, 8], strides = [1, 1]} : vector<3x8xi32> to vector<1x8xi32>
    %103 = vector.broadcast %101 : vector<8x1xi32> to vector<8x8xi32>
    %104 = vector.broadcast %102 : vector<1x8xi32> to vector<8x8xi32>
    %105 = arith.cmpi eq, %103, %104 : vector<8x8xi32>
    %106 = arith.extui %105 : vector<8x8xi1> to vector<8x8xi32>
    %107 = vector.extract_strided_slice %63 {offsets = [0, 2], sizes = [8, 1], strides = [1, 1]} : vector<8x3xi32> to vector<8x1xi32>
    %108 = vector.extract_strided_slice %66 {offsets = [2, 0], sizes = [1, 8], strides = [1, 1]} : vector<3x8xi32> to vector<1x8xi32>
    %109 = vector.broadcast %107 : vector<8x1xi32> to vector<8x8xi32>
    %110 = vector.broadcast %108 : vector<1x8xi32> to vector<8x8xi32>
    %111 = arith.muli %109, %110 : vector<8x8xi32>
    %112 = arith.muli %98, %106 : vector<8x8xi32>
    %113 = arith.muli %112, %111 : vector<8x8xi32>
    %114 = arith.addi %100, %113 : vector<8x8xi32>
    %115 = vector.broadcast %68 : vector<8x1xi32> to vector<8x8xi32>
    %116 = vector.broadcast %70 : vector<1x8xi32> to vector<8x8xi32>
    %117 = arith.addi %115, %116 : vector<8x8xi32>
    %c2_i32 = arith.constant 2 : i32
    %118 = vector.broadcast %c2_i32 : i32 to vector<8x8xi32>
    %119 = arith.muli %118, %114 : vector<8x8xi32>
    %120 = arith.subi %117, %119 : vector<8x8xi32>
    %c0_27 = arith.constant 0 : index
    %c0_28 = arith.constant 0 : index
    %121 = vector.load %arg6[%c0_27, %c0_28] : memref<8x8xi32, #tpu.memory_space<vmem>>, vector<8x8xi32>
    tpu.vector_store %arg6[%c0_27, %c0_28], %120 {strides = array<i32>} : memref<8x8xi32, #tpu.memory_space<vmem>>, vector<8x8xi32>,
    return
  }
  func.func @transform_0(%arg0: i32) -> (i32, i32) {
    %c0_i32 = arith.constant 0 : i32
    %c0_i32_0 = arith.constant 0 : i32
    %c0_i32_1 = arith.constant 0 : i32
    return %c0_i32, %c0_i32_0 : i32, i32
  }
  func.func @transform_1(%arg0: i32) -> (i32, i32) {
    %c0_i32 = arith.constant 0 : i32
    %c0_i32_0 = arith.constant 0 : i32
    %c0_i32_1 = arith.constant 0 : i32
    return %c0_i32, %c0_i32_0 : i32, i32
  }
  func.func @transform_2(%arg0: i32) -> (i32, i32) {
    %c0_i32 = arith.constant 0 : i32
    %c0_i32_0 = arith.constant 0 : i32
    %c0_i32_1 = arith.constant 0 : i32
    return %c0_i32, %c0_i32_0 : i32, i32
  }
  func.func @transform_3(%arg0: i32) -> (i32, i32) {
    %c0_i32 = arith.constant 0 : i32
    %c0_i32_0 = arith.constant 0 : i32
    %c0_i32_1 = arith.constant 0 : i32
    return %c0_i32, %c0_i32_0 : i32, i32
  }
  func.func @transform_4(%arg0: i32) -> (i32, i32) {
    %c0_i32 = arith.constant 0 : i32
    %c0_i32_0 = arith.constant 0 : i32
    %c0_i32_1 = arith.constant 0 : i32
    return %c0_i32, %c0_i32_0 : i32, i32
  }
  func.func @transform_5(%arg0: i32) -> (i32, i32) {
    %c0_i32 = arith.constant 0 : i32
    %c0_i32_0 = arith.constant 0 : i32
    %c0_i32_1 = arith.constant 0 : i32
    return %c0_i32, %c0_i32_0 : i32, i32
  }
}

</mosaic_0001>

<llo_original>
// kernel: compute_embed.1
$region0: #{compute_embed.1}
  #allocation0 [shape = 'u32[]', space=smem, size = 0x4, offset = 0x4, fixed_abs, tag = 'smem constant byte address 0x4 - core index']
  #allocation1 [shape = 'u32[72,128]{1,0:T(1,128)}', space=vmem, size = 0x9000, scoped, tag = 'internal scratch']
  %s0 = inlined_call_operand.vmem [shape: s32[3,256], index: 0, kind: input, shape index: {}]
  %s1 = inlined_call_operand.hbm [shape: f32[64,32], index: 1, kind: input, shape index: {}]
  %s2 = inlined_call_operand.vmem [shape: s32[8,3], index: 2, kind: input, shape index: {}]
  %s3 = inlined_call_operand.vmem [shape: s32[3,8], index: 3, kind: input, shape index: {}]
  %s4 = inlined_call_operand.vmem [shape: f32[32,256], index: 4, kind: output, shape index: {0}]
  %s5 = inlined_call_operand.hbm [shape: s32[8,8], index: 5, kind: output, shape index: {1}]
  %6 = xla_tuple %s4, %s5
  %s7 = sld [smem:[#allocation0]]
  $region38: #{compute_embed.1} parent=0
    _
  %s9 = ssub.s32 1, %s7
  %s10 = scalar_select 0, %s9, %s7
  $region1: #{compute_embed.1} parent=0
    #allocation2 [shape = 'u8[32768]{0}', space=vmem, size = 0x8000, scoped, tag = 'input window, operand 1, single buffered']
    #allocation3 [shape = 's32[1]{0}', space=sflag, size = 0x4, scoped, tag = 'scoped memory for compute_embed.1']
    #allocation4 [shape = 's32[1]{0}', space=sflag, size = 0x4, scoped, tag = 'scoped memory for compute_embed.1']
    #allocation5 [shape = 'u8[4096]{0}', space=vmem, size = 0x1000, scoped, tag = 'output window, operand 1, single buffered']
    %11 = vsyncpa [#allocation3], 0
    %12 = vsyncpa [#allocation4], 0
    // Predicated region
    $region2: #{compute_embed.1} parent=1 // pred_check
      _
    $region3: #{compute_embed.1} parent=1 // pred_check_branch
      %14 = sbr.rel (0) target = $region5
    $region4: #{compute_embed.1} parent=1 // pred_region
      _
    $region5: #{compute_embed.1} parent=1 // pred_fallthru
      _
    // Predicated region
    $region6: #{compute_embed.1} parent=1 // pred_check
      _
    $region7: #{compute_embed.1} parent=1 // pred_check_branch
      %16 = sbr.rel (0) target = $region9
    $region8: #{compute_embed.1} parent=1 // pred_region
      %18 = vsyncadd [#allocation3], 0
      %s19 = sshll.u32 %s1, 4
      %s20 = int_to_ptr.hbm [resolvable:$true] %s19
      %s21 = sshll.u32 [#allocation2], 4
      %s22 = int_to_ptr.vmem [resolvable:$true] %s21
      %27 = dma.hbm_to_vmem [thread:$0]  %s20, 1024, %s22, [#allocation3], 128, 128, 8
    $region9: #{compute_embed.1} parent=1 // pred_fallthru
      _
    // Predicated region
    $region10: #{compute_embed.1} parent=1 // pred_check
      _
    $region11: #{compute_embed.1} parent=1 // pred_check_branch
      %29 = sbr.rel (0) target = $region13
    $region12: #{compute_embed.1} parent=1 // pred_region
      _
    $region13: #{compute_embed.1} parent=1 // pred_fallthru
      _
    // Predicated region
    $region14: #{compute_embed.1} parent=1 // pred_check
      _
    $region15: #{compute_embed.1} parent=1 // pred_check_branch
      %31 = sbr.rel (0) target = $region17
    $region16: #{compute_embed.1} parent=1 // pred_region
      _
    $region17: #{compute_embed.1} parent=1 // pred_fallthru
      _
    // Predicated region
    $region18: #{compute_embed.1} parent=1 // pred_check
      _
    $region19: #{compute_embed.1} parent=1 // pred_check_branch
      %33 = sbr.rel (0) target = $region21
    $region20: #{compute_embed.1} parent=1 // pred_region
      %35 = dma.done [#allocation3], 1024
    $region21: #{compute_embed.1} parent=1 // pred_fallthru
      _
    %v36 = vlaneseq
    %v37 = vshrl.u32 %v36, 7
    %v38 = vadd.s32 %v37, 8
    %v39 = vadd.s32 %v37, 16
    %v40 = vadd.s32 %v37, 24
    %v41 = vlaneseq
    %v42 = vand.u32 %v41, 127
    %v43 = vadd.s32 %v42, 128
    %vm44 = vcmp.lt.s32.totalorder %v42, 0
    %v45 = vsub.s32 0, %v42
    %v46 = vsel %vm44, %v45, %v42
    %v47 = vshrl.u32 %v46, 5
    %v48 = vand.u32 %v46, 31
    %v49 = vsub.s32 0, %v48
    %v50 = vsel %vm44, %v49, %v48
    %vm51 = vcmp.lt.s32.totalorder %v43, 0
    %v52 = vsub.s32 0, %v43
    %v53 = vsel %vm51, %v52, %v43
    %v54 = vshrl.u32 %v53, 5
    %v55 = vand.u32 %v53, 31
    %v56 = vsub.s32 0, %v55
    %v57 = vsel %vm51, %v56, %v55
    %vm58 = vcmp.ne.s32.totalorder %v50, 0
    %vm59 = vcmp.ne.s32.totalorder %v57, 0
    %vm60 = vcmp.lt.s32.totalorder %v50, 0
    %vm61 = vcmp.lt.s32.totalorder %v57, 0
    %vm62 = vmand %vm60, %vm58
    %vm63 = vmand %vm61, %vm59
    %v64 = vadd.s32 %v50, 32
    %v65 = vadd.s32 %v57, 32
    %v66 = vsel %vm62, %v64, %v50
    %v67 = vsel %vm63, %v65, %v57
    %vm68 = vcmp.eq.s32.totalorder %v37, %v66
    %vm69 = vcmp.eq.s32.totalorder %v37, %v67
    %vm70 = vcmp.eq.s32.totalorder %v38, %v66
    %vm71 = vcmp.eq.s32.totalorder %v38, %v67
    %vm72 = vcmp.eq.s32.totalorder %v39, %v66
    %vm73 = vcmp.eq.s32.totalorder %v39, %v67
    %vm74 = vcmp.eq.s32.totalorder %v40, %v66
    %vm75 = vcmp.eq.s32.totalorder %v40, %v67
    %v76 = vsel %vm68, 1, 0
    %v77 = vsel %vm69, 1, 0
    %v78 = vsel %vm70, 1, 0
    %v79 = vsel %vm71, 1, 0
    %v80 = vsel %vm72, 1, 0
    %v81 = vsel %vm73, 1, 0
    %v82 = vsel %vm74, 1, 0
    %v83 = vsel %vm75, 1, 0
    %v84 = vcvt.s32.f32 %v76
    %v85 = vcvt.s32.f32 %v77
    %v86 = vcvt.s32.f32 %v78
    %v87 = vcvt.s32.f32 %v79
    %v88 = vcvt.s32.f32 %v80
    %v89 = vcvt.s32.f32 %v81
    %v90 = vcvt.s32.f32 %v82
    %v91 = vcvt.s32.f32 %v83
    %v92 = vld [vmem:[#allocation2] sm:$0xff]
    %v93 = vld [vmem:[#allocation2 + $0x8] sm:$0xff]
    %v94 = vld [vmem:[#allocation2 + $0x10] sm:$0xff]
    %v95 = vld [vmem:[#allocation2 + $0x18] sm:$0xff]
    %v96 = vld [vmem:[#allocation2 + $0x20] sm:$0xff]
    %v97 = vld [vmem:[#allocation2 + $0x28] sm:$0xff]
    %v98 = vld [vmem:[#allocation2 + $0x30] sm:$0xff]
    %v99 = vld [vmem:[#allocation2 + $0x38] sm:$0xff]
    %v100 = vld [vmem:[%s0] ss:$4 sm:$0x3]
    %v101 = vperm.slane %v100, 0
    %v102 = vperm.slane %v100, 1
    %vm103 = vcmask 261120
    %v105 = vsel %vm103, %v92, 0
    %v108 = vsel %vm103, %v93, 0
    %v111 = vsel %vm103, %v94, 0
    %v114 = vsel %vm103, %v95, 0
    %v117 = vsel %vm103, %v96, 0
    %v120 = vsel %vm103, %v97, 0
    %v123 = vsel %vm103, %v98, 0
    %v126 = vsel %vm103, %v99, 0
    %128 = vmatpush.msra.mxu0 0.0
    %129 = vmatpush.msra.mxu0 0.0
    %130 = vmatpush.msra.mxu0 0.0
    %131 = vmatpush.msra.mxu0 0.0
    %132 = vmatpush.msra.mxu0 0.0
    %133 = vmatpush.msra.mxu0 0.0
    %134 = vmatpush.msra.mxu0 0.0
    %135 = vmatpush.msra.mxu0 0.0
    %136 = vmatpush.msra.mxu0 0.0
    %137 = vmatpush.msra.mxu0 0.0
    %138 = vmatpush.msra.mxu0 0.0
    %139 = vmatpush.msra.mxu0 0.0
    %140 = vmatpush.msra.mxu0 %v90
    %141 = vmatpush.msra.mxu0 %v88
    %142 = vmatpush.msra.mxu0 %v86
    %143 = vmatpush.msra.mxu0 %v84
    %144 = vmatmul.f32.gmra.mxu0 %v105
    %v145 = vpop.f32.mrf.mxu0
    %v146 = vadd.f32 0.0, %v145
    %147 = vmatmul.f32.gmra.mxu0 %v108
    %v148 = vpop.f32.mrf.mxu0
    %v149 = vadd.f32 0.0, %v148
    %150 = vmatmul.f32.gmra.mxu0 %v111
    %v151 = vpop.f32.mrf.mxu0
    %v152 = vadd.f32 0.0, %v151
    %153 = vmatmul.f32.gmra.mxu0 %v114
    %v154 = vpop.f32.mrf.mxu0
    %v155 = vadd.f32 0.0, %v154
    %156 = vmatmul.f32.gmra.mxu0 %v117
    %v157 = vpop.f32.mrf.mxu0
    %v158 = vadd.f32 0.0, %v157
    %159 = vmatmul.f32.gmra.mxu0 %v120
    %v160 = vpop.f32.mrf.mxu0
    %v161 = vadd.f32 0.0, %v160
    %162 = vmatmul.f32.gmra.mxu0 %v123
    %v163 = vpop.f32.mrf.mxu0
    %v164 = vadd.f32 0.0, %v163
    %165 = vmatmul.f32.gmra.mxu0 %v126
    %v166 = vpop.f32.mrf.mxu0
    %v167 = vadd.f32 0.0, %v166
    %168 = vdwg.mxu0
    %169 = vmatpush.msra.mxu0 0.0
    %170 = vmatpush.msra.mxu0 0.0
    %171 = vmatpush.msra.mxu0 0.0
    %172 = vmatpush.msra.mxu0 0.0
    %173 = vmatpush.msra.mxu0 0.0
    %174 = vmatpush.msra.mxu0 0.0
    %175 = vmatpush.msra.mxu0 0.0
    %176 = vmatpush.msra.mxu0 0.0
    %177 = vmatpush.msra.mxu0 0.0
    %178 = vmatpush.msra.mxu0 0.0
    %179 = vmatpush.msra.mxu0 0.0
    %180 = vmatpush.msra.mxu0 0.0
    %181 = vmatpush.msra.mxu0 %v91
    %182 = vmatpush.msra.mxu0 %v89
    %183 = vmatpush.msra.mxu0 %v87
    %184 = vmatpush.msra.mxu0 %v85
    %185 = vmatmul.f32.gmra.mxu0 %v105
    %v186 = vpop.f32.mrf.mxu0
    %v187 = vadd.f32 0.0, %v186
    %188 = vmatmul.f32.gmra.mxu0 %v108
    %v189 = vpop.f32.mrf.mxu0
    %v190 = vadd.f32 0.0, %v189
    %191 = vmatmul.f32.gmra.mxu0 %v111
    %v192 = vpop.f32.mrf.mxu0
    %v193 = vadd.f32 0.0, %v192
    %194 = vmatmul.f32.gmra.mxu0 %v114
    %v195 = vpop.f32.mrf.mxu0
    %v196 = vadd.f32 0.0, %v195
    %197 = vmatmul.f32.gmra.mxu0 %v117
    %v198 = vpop.f32.mrf.mxu0
    %v199 = vadd.f32 0.0, %v198
    %200 = vmatmul.f32.gmra.mxu0 %v120
    %v201 = vpop.f32.mrf.mxu0
    %v202 = vadd.f32 0.0, %v201
    %203 = vmatmul.f32.gmra.mxu0 %v123
    %v204 = vpop.f32.mrf.mxu0
    %v205 = vadd.f32 0.0, %v204
    %206 = vmatmul.f32.gmra.mxu0 %v126
    %v207 = vpop.f32.mrf.mxu0
    %v208 = vadd.f32 0.0, %v207
    %209 = vdwg.mxu0
    %vm210 = vcmp.eq.s32.totalorder %v101, 0
    %vm211 = vcmp.eq.s32.totalorder %v102, 0
    %v212 = vsel %vm210, %v146, %v84
    %v213 = vsel %vm211, %v187, %v85
    %v214 = vsel %vm210, %v149, %v86
    %v215 = vsel %vm211, %v190, %v87
    %v216 = vsel %vm210, %v152, %v88
    %v217 = vsel %vm211, %v193, %v89
    %v218 = vsel %vm210, %v155, %v90
    %v219 = vsel %vm211, %v196, %v91
    %vm220 = vcmp.eq.s32.totalorder %v101, 1
    %vm221 = vcmp.eq.s32.totalorder %v102, 1
    %v222 = vsel %vm220, %v158, %v212
    %v223 = vsel %vm221, %v199, %v213
    %v224 = vsel %vm220, %v161, %v214
    %v225 = vsel %vm221, %v202, %v215
    %v226 = vsel %vm220, %v164, %v216
    %v227 = vsel %vm221, %v205, %v217
    %v228 = vsel %vm220, %v167, %v218
    %v229 = vsel %vm221, %v208, %v219
    %s230 = scalar_lea.vmem %s0, 1
    %v231 = vld [vmem:[%s230] ss:$4 sm:$0x3]
    %v232 = vperm.slane %v231, 0
    %v233 = vperm.slane %v231, 1
    %234 = vmatpush.msra.mxu0 0.0
    %235 = vmatpush.msra.mxu0 0.0
    %236 = vmatpush.msra.mxu0 0.0
    %237 = vmatpush.msra.mxu0 0.0
    %238 = vmatpush.msra.mxu0 0.0
    %239 = vmatpush.msra.mxu0 0.0
    %240 = vmatpush.msra.mxu0 0.0
    %241 = vmatpush.msra.mxu0 0.0
    %242 = vmatpush.msra.mxu0 0.0
    %243 = vmatpush.msra.mxu0 0.0
    %244 = vmatpush.msra.mxu0 0.0
    %245 = vmatpush.msra.mxu0 0.0
    %246 = vmatpush.msra.mxu0 %v228
    %247 = vmatpush.msra.mxu0 %v226
    %248 = vmatpush.msra.mxu0 %v224
    %249 = vmatpush.msra.mxu0 %v222
    %250 = vmatmul.f32.gmra.mxu0 %v105
    %v251 = vpop.f32.mrf.mxu0
    %v252 = vadd.f32 0.0, %v251
    %253 = vmatmul.f32.gmra.mxu0 %v108
    %v254 = vpop.f32.mrf.mxu0
    %v255 = vadd.f32 0.0, %v254
    %256 = vmatmul.f32.gmra.mxu0 %v111
    %v257 = vpop.f32.mrf.mxu0
    %v258 = vadd.f32 0.0, %v257
    %259 = vmatmul.f32.gmra.mxu0 %v114
    %v260 = vpop.f32.mrf.mxu0
    %v261 = vadd.f32 0.0, %v260
    %262 = vmatmul.f32.gmra.mxu0 %v117
    %v263 = vpop.f32.mrf.mxu0
    %v264 = vadd.f32 0.0, %v263
    %265 = vmatmul.f32.gmra.mxu0 %v120
    %v266 = vpop.f32.mrf.mxu0
    %v267 = vadd.f32 0.0, %v266
    %268 = vmatmul.f32.gmra.mxu0 %v123
    %v269 = vpop.f32.mrf.mxu0
    %v270 = vadd.f32 0.0, %v269
    %271 = vmatmul.f32.gmra.mxu0 %v126
    %v272 = vpop.f32.mrf.mxu0
    %v273 = vadd.f32 0.0, %v272
    %274 = vdwg.mxu0
    %275 = vmatpush.msra.mxu0 0.0
    %276 = vmatpush.msra.mxu0 0.0
    %277 = vmatpush.msra.mxu0 0.0
    %278 = vmatpush.msra.mxu0 0.0
    %279 = vmatpush.msra.mxu0 0.0
    %280 = vmatpush.msra.mxu0 0.0
    %281 = vmatpush.msra.mxu0 0.0
    %282 = vmatpush.msra.mxu0 0.0
    %283 = vmatpush.msra.mxu0 0.0
    %284 = vmatpush.msra.mxu0 0.0
    %285 = vmatpush.msra.mxu0 0.0
    %286 = vmatpush.msra.mxu0 0.0
    %287 = vmatpush.msra.mxu0 %v229
    %288 = vmatpush.msra.mxu0 %v227
    %289 = vmatpush.msra.mxu0 %v225
    %290 = vmatpush.msra.mxu0 %v223
    %291 = vmatmul.f32.gmra.mxu0 %v105
    %v292 = vpop.f32.mrf.mxu0
    %v293 = vadd.f32 0.0, %v292
    %294 = vmatmul.f32.gmra.mxu0 %v108
    %v295 = vpop.f32.mrf.mxu0
    %v296 = vadd.f32 0.0, %v295
    %297 = vmatmul.f32.gmra.mxu0 %v111
    %v298 = vpop.f32.mrf.mxu0
    %v299 = vadd.f32 0.0, %v298
    %300 = vmatmul.f32.gmra.mxu0 %v114
    %v301 = vpop.f32.mrf.mxu0
    %v302 = vadd.f32 0.0, %v301
    %303 = vmatmul.f32.gmra.mxu0 %v117
    %v304 = vpop.f32.mrf.mxu0
    %v305 = vadd.f32 0.0, %v304
    %306 = vmatmul.f32.gmra.mxu0 %v120
    %v307 = vpop.f32.mrf.mxu0
    %v308 = vadd.f32 0.0, %v307
    %309 = vmatmul.f32.gmra.mxu0 %v123
    %v310 = vpop.f32.mrf.mxu0
    %v311 = vadd.f32 0.0, %v310
    %312 = vmatmul.f32.gmra.mxu0 %v126
    %v313 = vpop.f32.mrf.mxu0
    %v314 = vadd.f32 0.0, %v313
    %315 = vdwg.mxu0
    %vm316 = vcmp.eq.s32.totalorder %v232, 0
    %vm317 = vcmp.eq.s32.totalorder %v233, 0
    %v318 = vsel %vm316, %v252, %v222
    %v319 = vsel %vm317, %v293, %v223
    %v320 = vsel %vm316, %v255, %v224
    %v321 = vsel %vm317, %v296, %v225
    %v322 = vsel %vm316, %v258, %v226
    %v323 = vsel %vm317, %v299, %v227
    %v324 = vsel %vm316, %v261, %v228
    %v325 = vsel %vm317, %v302, %v229
    %vm326 = vcmp.eq.s32.totalorder %v232, 1
    %vm327 = vcmp.eq.s32.totalorder %v233, 1
    %v328 = vsel %vm326, %v264, %v318
    %v329 = vsel %vm327, %v305, %v319
    %v330 = vsel %vm326, %v267, %v320
    %v331 = vsel %vm327, %v308, %v321
    %v332 = vsel %vm326, %v270, %v322
    %v333 = vsel %vm327, %v311, %v323
    %v334 = vsel %vm326, %v273, %v324
    %v335 = vsel %vm327, %v314, %v325
    %s336 = scalar_lea.vmem %s0, 2
    %v337 = vld [vmem:[%s336] ss:$4 sm:$0x3]
    %v338 = vperm.slane %v337, 0
    %v339 = vperm.slane %v337, 1
    %340 = vmatpush.msra.mxu0 0.0
    %341 = vmatpush.msra.mxu0 0.0
    %342 = vmatpush.msra.mxu0 0.0
    %343 = vmatpush.msra.mxu0 0.0
    %344 = vmatpush.msra.mxu0 0.0
    %345 = vmatpush.msra.mxu0 0.0
    %346 = vmatpush.msra.mxu0 0.0
    %347 = vmatpush.msra.mxu0 0.0
    %348 = vmatpush.msra.mxu0 0.0
    %349 = vmatpush.msra.mxu0 0.0
    %350 = vmatpush.msra.mxu0 0.0
    %351 = vmatpush.msra.mxu0 0.0
    %352 = vmatpush.msra.mxu0 %v334
    %353 = vmatpush.msra.mxu0 %v332
    %354 = vmatpush.msra.mxu0 %v330
    %355 = vmatpush.msra.mxu0 %v328
    %356 = vmatmul.f32.gmra.mxu0 %v105
    %v357 = vpop.f32.mrf.mxu0
    %v358 = vadd.f32 0.0, %v357
    %359 = vmatmul.f32.gmra.mxu0 %v108
    %v360 = vpop.f32.mrf.mxu0
    %v361 = vadd.f32 0.0, %v360
    %362 = vmatmul.f32.gmra.mxu0 %v111
    %v363 = vpop.f32.mrf.mxu0
    %v364 = vadd.f32 0.0, %v363
    %365 = vmatmul.f32.gmra.mxu0 %v114
    %v366 = vpop.f32.mrf.mxu0
    %v367 = vadd.f32 0.0, %v366
    %368 = vmatmul.f32.gmra.mxu0 %v117
    %v369 = vpop.f32.mrf.mxu0
    %v370 = vadd.f32 0.0, %v369
    %371 = vmatmul.f32.gmra.mxu0 %v120
    %v372 = vpop.f32.mrf.mxu0
    %v373 = vadd.f32 0.0, %v372
    %374 = vmatmul.f32.gmra.mxu0 %v123
    %v375 = vpop.f32.mrf.mxu0
    %v376 = vadd.f32 0.0, %v375
    %377 = vmatmul.f32.gmra.mxu0 %v126
    %v378 = vpop.f32.mrf.mxu0
    %v379 = vadd.f32 0.0, %v378
    %380 = vdwg.mxu0
    %381 = vmatpush.msra.mxu0 0.0
    %382 = vmatpush.msra.mxu0 0.0
    %383 = vmatpush.msra.mxu0 0.0
    %384 = vmatpush.msra.mxu0 0.0
    %385 = vmatpush.msra.mxu0 0.0
    %386 = vmatpush.msra.mxu0 0.0
    %387 = vmatpush.msra.mxu0 0.0
    %388 = vmatpush.msra.mxu0 0.0
    %389 = vmatpush.msra.mxu0 0.0
    %390 = vmatpush.msra.mxu0 0.0
    %391 = vmatpush.msra.mxu0 0.0
    %392 = vmatpush.msra.mxu0 0.0
    %393 = vmatpush.msra.mxu0 %v335
    %394 = vmatpush.msra.mxu0 %v333
    %395 = vmatpush.msra.mxu0 %v331
    %396 = vmatpush.msra.mxu0 %v329
    %397 = vmatmul.f32.gmra.mxu0 %v105
    %v398 = vpop.f32.mrf.mxu0
    %v399 = vadd.f32 0.0, %v398
    %400 = vmatmul.f32.gmra.mxu0 %v108
    %v401 = vpop.f32.mrf.mxu0
    %v402 = vadd.f32 0.0, %v401
    %403 = vmatmul.f32.gmra.mxu0 %v111
    %v404 = vpop.f32.mrf.mxu0
    %v405 = vadd.f32 0.0, %v404
    %406 = vmatmul.f32.gmra.mxu0 %v114
    %v407 = vpop.f32.mrf.mxu0
    %v408 = vadd.f32 0.0, %v407
    %409 = vmatmul.f32.gmra.mxu0 %v117
    %v410 = vpop.f32.mrf.mxu0
    %v411 = vadd.f32 0.0, %v410
    %412 = vmatmul.f32.gmra.mxu0 %v120
    %v413 = vpop.f32.mrf.mxu0
    %v414 = vadd.f32 0.0, %v413
    %415 = vmatmul.f32.gmra.mxu0 %v123
    %v416 = vpop.f32.mrf.mxu0
    %v417 = vadd.f32 0.0, %v416
    %418 = vmatmul.f32.gmra.mxu0 %v126
    %v419 = vpop.f32.mrf.mxu0
    %v420 = vadd.f32 0.0, %v419
    %421 = vdwg.mxu0
    %vm422 = vcmp.eq.s32.totalorder %v338, 0
    %vm423 = vcmp.eq.s32.totalorder %v339, 0
    %v424 = vsel %vm422, %v358, %v328
    %v425 = vsel %vm423, %v399, %v329
    %v426 = vsel %vm422, %v361, %v330
    %v427 = vsel %vm423, %v402, %v331
    %v428 = vsel %vm422, %v364, %v332
    %v429 = vsel %vm423, %v405, %v333
    %v430 = vsel %vm422, %v367, %v334
    %v431 = vsel %vm423, %v408, %v335
    %vm432 = vcmp.eq.s32.totalorder %v338, 1
    %vm433 = vcmp.eq.s32.totalorder %v339, 1
    %v434 = vsel %vm432, %v370, %v424
    %v435 = vsel %vm433, %v411, %v425
    %v436 = vsel %vm432, %v373, %v426
    %v437 = vsel %vm433, %v414, %v427
    %v438 = vsel %vm432, %v376, %v428
    %v439 = vsel %vm433, %v417, %v429
    %v440 = vsel %vm432, %v379, %v430
    %v441 = vsel %vm433, %v420, %v431
    %442 = vst [vmem:[%s4] sm:$0xff] %v434
    %443 = vst [vmem:[%s4 + $0x8] sm:$0xff] %v435
    %444 = vst [vmem:[%s4 + $0x10] sm:$0xff] %v436
    %445 = vst [vmem:[%s4 + $0x18] sm:$0xff] %v437
    %446 = vst [vmem:[%s4 + $0x20] sm:$0xff] %v438
    %447 = vst [vmem:[%s4 + $0x28] sm:$0xff] %v439
    %448 = vst [vmem:[%s4 + $0x30] sm:$0xff] %v440
    %449 = vst [vmem:[%s4 + $0x38] sm:$0xff] %v441
    %v450 = vld [vmem:[%s2] sm:$0xff]
    %v451 = vld [vmem:[%s3] sm:$0x7]
    %vm452 = vcmp.ne.s32.totalorder %v450, 3
    %v453 = vsel %vm452, 1, 0
    %vm454 = vcmp.ne.s32.totalorder %v451, 3
    %v455 = vsel %vm454, 1, 0
    %vm456 = vcmask 23552
    %v457 = vsel %vm456, %v453, 0
    %v458 = vand.u32 %v457, 65535
    %v459 = vshrl.u32 %v457, 16
    %v460 = vcvt.s32.f32 %v458
    %v461 = vcvt.s32.f32 %v459
    %462 = vadd.xlane.f32.xlu0 %v460
    %v463 = vpop.xlane.xlu0 %462
    %464 = vadd.xlane.f32.xlu0 %v461
    %v465 = vpop.xlane.xlu0 %464
    %v466 = vcvt.f32.s32 %v463
    %v467 = vcvt.f32.s32 %v465
    %v468 = vshll.u32 %v467, 16
    %v469 = vadd.s32 %v468, %v466
    %vm470 = vcmask 59392
    %v471 = vsel %vm470, %v455, 0
    %v472 = vrot.slane %v471, 4
    %v473 = vadd.s32 %v471, %v472
    %v474 = vrot.slane %v473, 2
    %v475 = vadd.s32 %v473, %v474
    %v476 = vrot.slane %v475, 1
    %v477 = vadd.s32 %v475, %v476
    %478 = vset.pattern.permute.xlu0 0
    %479 = vperm.xlu0 %478, %v450
    %v480 = vpop.permute.xlu0 %479
    %v481 = vperm.slane %v451, 0
    %vm482 = vcmp.eq.s32.totalorder %v480, %v481
    %v483 = vsel %vm482, 1, 0
    %484 = vset.pattern.permute.xlu0 0
    %485 = vperm.xlu0 %484, %v453
    %v486 = vpop.permute.xlu0 %485
    %v487 = vperm.slane %v455, 0
    %v488 = vmul.u32 %v486, %v487
    %v489 = vmul.u32 %v483, %v488
    %490 = vset.pattern.permute.xlu0 1
    %491 = vperm.xlu0 %490, %v450
    %v492 = vpop.permute.xlu0 %491
    %v493 = vperm.slane %v451, 1
    %vm494 = vcmp.eq.s32.totalorder %v492, %v493
    %v495 = vsel %vm494, 1, 0
    %496 = vset.pattern.permute.xlu0 1
    %497 = vperm.xlu0 %496, %v453
    %v498 = vpop.permute.xlu0 %497
    %v499 = vperm.slane %v455, 1
    %v500 = vmul.u32 %v498, %v499
    %v501 = vmul.u32 %v483, %v495
    %v502 = vmul.u32 %v501, %v500
    %v503 = vadd.s32 %v489, %v502
    %504 = vset.pattern.permute.xlu0 2
    %505 = vperm.xlu0 %504, %v450
    %v506 = vpop.permute.xlu0 %505
    %v507 = vperm.slane %v451, 2
    %vm508 = vcmp.eq.s32.totalorder %v506, %v507
    %v509 = vsel %vm508, 1, 0
    %510 = vset.pattern.permute.xlu0 2
    %511 = vperm.xlu0 %510, %v453
    %v512 = vpop.permute.xlu0 %511
    %v513 = vperm.slane %v455, 2
    %v514 = vmul.u32 %v512, %v513
    %v515 = vmul.u32 %v501, %v509
    %v516 = vmul.u32 %v515, %v514
    %v517 = vadd.s32 %v503, %v516
    %v518 = vadd.s32 %v469, %v477
    %v519 = vmul.u32 %v517, 2
    %v520 = vsub.s32 %v518, %v519
    %vm521 = vcmask 64512
    %522 = vst.msk [vmem:[#allocation5] sm:$0xff] %vm521, %v520
    // Predicated region
    $region22: #{compute_embed.1} parent=1 // pred_check
      _
    $region23: #{compute_embed.1} parent=1 // pred_check_branch
      %524 = sbr.rel (0) target = $region25
    $region24: #{compute_embed.1} parent=1 // pred_region
      _
    $region25: #{compute_embed.1} parent=1 // pred_fallthru
      _
    // Predicated region
    $region26: #{compute_embed.1} parent=1 // pred_check
      _
    $region27: #{compute_embed.1} parent=1 // pred_check_branch
      %526 = sbr.rel (0) target = $region29
    $region28: #{compute_embed.1} parent=1 // pred_region
      %528 = vsyncadd [#allocation4], 0
      %s530 = sshll.u32 [#allocation5], 4
      %s531 = int_to_ptr.vmem [resolvable:$true] %s530
      %s532 = sshll.u32 %s5, 4
      %s533 = int_to_ptr.hbm [resolvable:$true] %s532
      %535 = dma.vmem_to_hbm [thread:$0]  %s531, 128, %s533, [#allocation4]
    $region29: #{compute_embed.1} parent=1 // pred_fallthru
      _
    // Predicated region
    $region30: #{compute_embed.1} parent=1 // pred_check
      _
    $region31: #{compute_embed.1} parent=1 // pred_check_branch
      %537 = sbr.rel (0) target = $region33
    $region32: #{compute_embed.1} parent=1 // pred_region
      _
    $region33: #{compute_embed.1} parent=1 // pred_fallthru
      _
    // Predicated region
    $region34: #{compute_embed.1} parent=1 // pred_check
      _
    $region35: #{compute_embed.1} parent=1 // pred_check_branch
      %539 = sbr.rel (0) target = $region37
    $region36: #{compute_embed.1} parent=1 // pred_region
      %541 = dma.done [#allocation4], 128
    $region37: #{compute_embed.1} parent=1 // pred_fallthru
      _
    %542 = vsyncpa [#allocation3], 1
    %543 = vsyncpa [#allocation4], 1

</llo_original>
